<compile_context>
chip_gen: v6e
topology: v6e:2x2x1
jax: 0.10.0
libtpu: 0.0.40
codegen_flags: <defaults>
</compile_context>

<pallas_src>
import math
from functools import partial

import jax
import jax.numpy as jnp
from jax.experimental import pallas as pl
from jax.experimental.pallas import tpu as pltpu


# ----------------------------- helpers --------------------------------------


def _round_up(a: int, b: int) -> int:
    return ((a + b - 1) // b) * b


def _balanced(dim: int, cap: int, align: int) -> int:
    """Smallest tile (multiple of `align`, ~<= cap) that covers `dim` with
    ceil(dim/cap) tiles -> padding is at most one alignment unit."""
    n = max(1, -(-dim // cap))
    return _round_up(-(-dim // n), align)


def _hw_params():
    """Tile caps / budgets derived from the detected VMEM capacity."""
    vmem = 64 << 20  # conservative default = v7x per-TensorCore VMEM
    try:
        vmem = int(pltpu.get_tpu_info().vmem_capacity_bytes)
    except Exception:
        pass
    if vmem >= (100 << 20):  # v5e / v6e: 128 MiB VMEM
        tm_cap, tn_cap, tk_cap = 512, 1024, 2048
    else:                    # v7x: 64 MiB VMEM per TC
        tm_cap, tn_cap, tk_cap = 256, 512, 1536
    tile_budget = min(int(vmem * 0.55), 48 << 20)
    return {"vmem": vmem, "tm_cap": tm_cap, "tn_cap": tn_cap,
            "tk_cap": tk_cap, "tile_budget": tile_budget}


def _plan_nk(K, N, in_itemsize, out_itemsize, hw, tm_est, has_bias):
    """Choose (tn, tk) independently of M (so a layer can fix them at init)."""
    tn = _balanced(N, hw["tn_cap"], 128)
    # Ensure >= 2 lane-parallel tiles so both v7x TensorCores get work
    # (cheap on single-TC chips: one extra sequential grid step).
    if _round_up(N, tn) // tn == 1 and N >= 256:
        tn = _round_up(-(-N // 2), 128)

    # Largest K block that keeps the double-buffered footprint in budget.
    fixed = 2 * tm_est * tn * out_itemsize + tm_est * tn * 4
    if has_bias:
        fixed += 2 * tn * 4
    per_k = 2 * (tm_est + tn) * in_itemsize
    tk_fit = (hw["tile_budget"] - fixed) // per_k
    tk_fit = max(128, (tk_fit // 128) * 128)
    tk_fit = min(tk_fit, hw["tk_cap"])

    kp128 = _round_up(K, 128)
    if kp128 <= tk_fit:
        tk = kp128                      # single K block: no K grid, no RMW
    else:
        nk = -(-kp128 // tk_fit)
        tk = _round_up(-(-K // nk), 128)
    return tn, tk


def quick_gelu(v):
    """QuickGELU from the reference module: x * sigmoid(1.702 * x)."""
    return v * jax.nn.sigmoid(1.702 * v)


# ----------------------------- kernels --------------------------------------


def _accumulate_direct(x_ref, w_ref, o_ref):
    @pl.when(pl.program_id(2) == 0)
    def _():
        o_ref[...] = jnp.zeros_like(o_ref)
    o_ref[...] += jnp.dot(x_ref[...], w_ref[...],
                          preferred_element_type=jnp.float32)


def _epilogue_direct(o_ref, b_ref, activation):
    @pl.when(pl.program_id(2) == pl.num_programs(2) - 1)
    def _():
        y = o_ref[...]
        if b_ref is not None:
            y = y + b_ref[...]
        if activation is not None:
            y = activation(y)
        o_ref[...] = y


def _accumulate_scratch(x_ref, w_ref, acc_ref):
    @pl.when(pl.program_id(2) == 0)
    def _():
        acc_ref[...] = jnp.zeros_like(acc_ref)
    acc_ref[...] += jnp.dot(x_ref[...], w_ref[...],
                            preferred_element_type=jnp.float32)


def _finalize_scratch(acc_ref, o_ref, b_ref, activation):
    @pl.when(pl.program_id(2) == pl.num_programs(2) - 1)
    def _():
        y = acc_ref[...]
        if b_ref is not None:
            y = y + b_ref[...].astype(jnp.float32)
        if activation is not None:
            y = activation(y)
        o_ref[...] = y.astype(o_ref.dtype)


def _make_kernel(has_bias, activation, direct_f32):
    if direct_f32:
        if has_bias:
            def kernel(x_ref, w_ref, b_ref, o_ref):
                _accumulate_direct(x_ref, w_ref, o_ref)
                _epilogue_direct(o_ref, b_ref, activation)
        elif activation is not None:
            def kernel(x_ref, w_ref, o_ref):
                _accumulate_direct(x_ref, w_ref, o_ref)
                _epilogue_direct(o_ref, None, activation)
        else:
            def kernel(x_ref, w_ref, o_ref):
                _accumulate_direct(x_ref, w_ref, o_ref)
    else:
        if has_bias:
            def kernel(x_ref, w_ref, b_ref, o_ref, acc_ref):
                _accumulate_scratch(x_ref, w_ref, acc_ref)
                _finalize_scratch(acc_ref, o_ref, b_ref, activation)
        else:
            def kernel(x_ref, w_ref, o_ref, acc_ref):
                _accumulate_scratch(x_ref, w_ref, acc_ref)
                _finalize_scratch(acc_ref, o_ref, None, activation)
    return kernel


# ----------------------------- core pallas_call ------------------------------


def _matmul_padded(x2p, w2p, b2p, out_dtype, tm, tn, tk, activation):
    """x2p: [Mp, Kp], w2p: [Kp, Np], b2p: [1, Np] or None; all padded to tile
    multiples.  Returns act(x2p @ w2p + b) as [Mp, Np] in out_dtype."""
    Mp, Kp = x2p.shape
    Kp2, Np = w2p.shape
    assert Kp == Kp2
    assert Mp % tm == 0 and Np % tn == 0 and Kp % tk == 0

    in_itemsize = jnp.dtype(x2p.dtype).itemsize
    out_itemsize = jnp.dtype(out_dtype).itemsize
    has_bias = b2p is not None
    direct = jnp.dtype(out_dtype) == jnp.dtype(jnp.float32)

    grid = (Mp // tm, Np // tn, Kp // tk)
    gi, gj, gk = grid

    in_specs = [
        pl.BlockSpec((tm, tk), lambda i, j, k: (i, k)),
        pl.BlockSpec((tk, tn), lambda i, j, k: (k, j)),
    ]
    inputs = [x2p, w2p]
    if has_bias:
        in_specs.append(pl.BlockSpec((1, tn), lambda i, j, k: (0, j)))
        inputs.append(b2p)

    if direct:
        scratch_shapes = []
        scratch_bytes = 0
    else:
        scratch_shapes = [pltpu.VMEM((tm, tn), jnp.float32)]
        scratch_bytes = tm * tn * 4

    bias_bytes = 2 * tn * 4 if has_bias else 0
    footprint = (2 * (tm * tk + tk * tn) * in_itemsize
                 + 2 * tm * tn * out_itemsize + scratch_bytes + bias_bytes)
    hw = _hw_params()
    vmem_limit = max(int(footprint * 1.5) + (2 << 20), 4 << 20)
    vmem_limit = min(vmem_limit, hw["vmem"] * 3 // 4)

    cost = pl.CostEstimate(
        flops=2 * Mp * Np * Kp,
        transcendentals=Mp * Np if activation is not None else 0,
        bytes_accessed=(gj * Mp * Kp * in_itemsize        # x re-read per j tile
                        + gi * Kp * Np * in_itemsize      # w re-read per i tile
                        + Mp * Np * out_itemsize
                        + (Np * 4 if has_bias else 0)),
    )

    return pl.pallas_call(
        _make_kernel(has_bias, activation, direct),
        out_shape=jax.ShapeDtypeStruct((Mp, Np), out_dtype),
        grid_spec=pltpu.PrefetchScalarGridSpec(
            num_scalar_prefetch=0,
            grid=grid,
            in_specs=in_specs,
            out_specs=pl.BlockSpec((tm, tn), lambda i, j, k: (i, j)),
            scratch_shapes=scratch_shapes,
        ),
        compiler_params=pltpu.CompilerParams(
            dimension_semantics=("parallel", "parallel", "arbitrary"),
            vmem_limit_bytes=vmem_limit,
        ),
        cost_estimate=cost,
    )(*inputs)


# ----------------------------- functional wrapper ----------------------------


def linear_forward(x, weight, bias=None, *, activation=None, compute_dtype=None,
                   out_dtype=None, tm=None, tn=None, tk=None):
    """act(x @ weight + bias).  x: [..., K], weight: [K, N], bias: [N] or None.

    compute_dtype=None keeps f32 operands (reference semantics);
    compute_dtype=jnp.bfloat16 gives MXU-native rate with f32 accumulation.
    """
    *lead, K = x.shape
    Kw, N = weight.shape
    assert K == Kw, f"in_features mismatch: {K} vs {Kw}"
    M = math.prod(lead) if lead else 1
    out_dtype = out_dtype or x.dtype

    x2 = x.reshape(M, K)
    w2 = weight
    if compute_dtype is not None:
        x2 = x2.astype(compute_dtype)
        w2 = w2.astype(compute_dtype)

    in_itemsize = jnp.dtype(x2.dtype).itemsize
    out_itemsize = jnp.dtype(out_dtype).itemsize
    hw = _hw_params()
    m_align = max(8, 32 // in_itemsize)

    if tm is None:
        tm = _balanced(M, hw["tm_cap"], m_align)
    if tn is None or tk is None:
        tn_d, tk_d = _plan_nk(K, N, in_itemsize, out_itemsize, hw, tm,
                              bias is not None)
        tn = tn or tn_d
        tk = tk or tk_d

    Mp, Kp, Np = _round_up(M, tm), _round_up(K, tk), _round_up(N, tn)
    if (Mp, Kp) != (M, K):
        x2 = jnp.pad(x2, ((0, Mp - M), (0, Kp - K)))
    if (Kp, Np) != (K, N):
        w2 = jnp.pad(w2, ((0, Kp - K), (0, Np - N)))
    b2 = None
    if bias is not None:
        b2 = bias.astype(jnp.float32).reshape(1, N)
        if Np != N:
            b2 = jnp.pad(b2, ((0, 0), (0, Np - N)))

    out2 = _matmul_padded(x2, w2, b2, out_dtype, tm, tn, tk, activation)
    return out2[:M, :N].reshape(*lead, N)


# ----------------------------- hoisted layer ---------------------------------


class PallasLinear:
    """Deployment path: pads + casts weight/bias ONCE at construction (hoisted
    out of the per-call path) and defaults to bf16 operands with f32
    accumulation — the practical default on bf16-native MXUs."""

    def __init__(self, weight, bias=None, *, activation=None,
                 compute_dtype=jnp.bfloat16, out_dtype=None):
        K, N = weight.shape
        self.K, self.N = K, N
        self.activation = activation
        self.out_dtype = out_dtype
        cd = compute_dtype if compute_dtype is not None else weight.dtype
        self.compute_dtype = jnp.dtype(cd)
        in_itemsize = self.compute_dtype.itemsize
        self._hw = _hw_params()
        self._m_align = max(8, 32 // in_itemsize)
        self.tn, self.tk = _plan_nk(K, N, in_itemsize, 4, self._hw,
                                    self._hw["tm_cap"], bias is not None)
        Kp, Np = _round_up(K, self.tk), _round_up(N, self.tn)
        w = weight.astype(self.compute_dtype)
        if (Kp, Np) != (K, N):
            w = jnp.pad(w, ((0, Kp - K), (0, Np - N)))
        self.w_padded = w
        if bias is not None:
            b = bias.astype(jnp.float32).reshape(1, N)
            if Np != N:
                b = jnp.pad(b, ((0, 0), (0, Np - N)))
            self.b_padded = b
        else:
            self.b_padded = None

    def __call__(self, x):
        *lead, K = x.shape
        assert K == self.K
        M = math.prod(lead) if lead else 1
        out_dtype = self.out_dtype or x.dtype
        x2 = x.reshape(M, K).astype(self.compute_dtype)
        tm = _balanced(M, self._hw["tm_cap"], self._m_align)
        Mp = _round_up(M, tm)
        Kp = self.w_padded.shape[0]
        if (Mp, Kp) != (M, K):
            x2 = jnp.pad(x2, ((0, Mp - M), (0, Kp - K)))
        out2 = _matmul_padded(x2, self.w_padded, self.b_padded, out_dtype,
                              tm, self.tn, self.tk, self.activation)
        return out2[:M, :self.N].reshape(*lead, self.N)


def init_linear_params(key, in_features, out_features, dtype=jnp.float32):
    stdv = 1.0 / math.sqrt(out_features)
    return jax.random.uniform(
        key, (in_features, out_features), dtype=dtype, minval=-stdv, maxval=stdv
    )


# ----------------------------- tests -----------------------------------------


if __name__ == "__main__":
    key = jax.random.PRNGKey(0)
    ks = jax.random.split(key, 8)

    # ---- case 1: GraphConvolution projection  support = x @ W  (no bias, f32)
    batch, seq, vw = 2, 8, 32
    width = vw // 2
    x = jax.random.normal(ks[0], (batch, seq, vw), dtype=jnp.float32)
    w_gc = init_linear_params(ks[1], vw, width)
    out = jax.block_until_ready(linear_forward(x, w_gc))
    ref = jnp.matmul(x, w_gc)
    assert out.shape == (batch, seq, width)
    assert jnp.allclose(out, ref, atol=1e-5, rtol=1e-5), "mismatch (case 1)"

    # ---- case 2: fused nn.Linear(vw, 4*vw) + bias + QuickGELU (mlp c_fc path)
    w_fc = jax.random.normal(ks[2], (vw, 4 * vw), dtype=jnp.float32) * 0.05
    b_fc = jax.random.normal(ks[3], (4 * vw,), dtype=jnp.float32) * 0.05
    out2 = jax.block_until_ready(
        linear_forward(x, w_fc, b_fc, activation=quick_gelu))
    h = jnp.matmul(x, w_fc) + b_fc
    ref2 = h * jax.nn.sigmoid(1.702 * h)
    assert out2.shape == (batch, seq, 4 * vw)
    assert jnp.allclose(out2, ref2, atol=1e-5, rtol=1e-5), "mismatch (case 2)"

    # ---- case 3: awkward dims + forced small tiles -> exercises M/N/K padding
    #              and the K-grid accumulation path
    b2, s2, k2, n2 = 2, 5, 200, 300
    x_b = jax.random.normal(ks[4], (b2, s2, k2), dtype=jnp.float32)
    w_b = init_linear_params(ks[5], k2, n2)
    out_b = jax.block_until_ready(linear_forward(x_b, w_b, tm=8, tn=128, tk=128))
    ref_b = jnp.matmul(x_b, w_b)
    assert out_b.shape == (b2, s2, n2)
    assert jnp.allclose(out_b, ref_b, atol=1e-4, rtol=1e-4), "mismatch (case 3)"

    # ---- case 4: hoisted PallasLinear layer, bf16 operands (default),
    #              N split into >=2 parallel lane tiles
    b3, s3, k3, n3 = 2, 16, 128, 512
    x_c = jax.random.normal(ks[6], (b3, s3, k3), dtype=jnp.float32)
    w_c = init_linear_params(ks[7], k3, n3)
    layer = PallasLinear(w_c)  # bf16 operands, f32 accumulation, weight pre-padded
    out_c = jax.block_until_ready(layer(x_c))
    ref_c = jnp.matmul(x_c, w_c)
    assert out_c.shape == (b3, s3, n3)
    assert float(jnp.max(jnp.abs(out_c - ref_c))) < 3e-2, "mismatch (case 4, bf16)"

    print("KERNEL_OK")
</pallas_src>

<mosaic_0001>
module attributes {stable_mosaic.version = 11 : i64} {
  func.func @kernel(%arg0: i32, %arg1: i32, %arg2: i32, %arg3: memref<16x128xf32, #tpu.memory_space<vmem>>, %arg4: memref<128x128xf32, #tpu.memory_space<vmem>>, %arg5: memref<16x128xf32, #tpu.memory_space<vmem>>) attributes {dimension_semantics = [#tpu.dimension_semantics<parallel>, #tpu.dimension_semantics<parallel>, #tpu.dimension_semantics<arbitrary>], iteration_bounds = array<i64: 1, 1, 1>, scalar_prefetch = 0 : i64, scratch_operands = 0 : i64, tpu.core_type = #tpu.core_type<tc>, window_params = [{transform_indices = @transform_0, window_bounds = array<i64: 16, 128>}, {transform_indices = @transform_1, window_bounds = array<i64: 128, 128>}, {transform_indices = @transform_2, window_bounds = array<i64: 16, 128>}]} {
    %c0_i32 = arith.constant 0 : i32
    %0 = arith.cmpi eq, %arg2, %c0_i32 : i32
    %1 = arith.extui %0 : i1 to i32
    %c0_i32_0 = arith.constant 0 : i32
    %2 = arith.cmpi ne, %1, %c0_i32_0 : i32
    scf.if %2 {
      %cst_8 = arith.constant 0.000000e+00 : f32
      %9 = vector.broadcast %cst_8 : f32 to vector<16x128xf32>
      %c0_9 = arith.constant 0 : index
      %c0_10 = arith.constant 0 : index
      %10 = vector.load %arg5[%c0_9, %c0_10] : memref<16x128xf32, #tpu.memory_space<vmem>>, vector<16x128xf32>
      tpu.vector_store %arg5[%c0_9, %c0_10], %9 {strides = array<i32>} : memref<16x128xf32, #tpu.memory_space<vmem>>, vector<16x128xf32>,
    } else {
    }
    %c0 = arith.constant 0 : index
    %c0_1 = arith.constant 0 : index
    %3 = vector.load %arg5[%c0, %c0_1] : memref<16x128xf32, #tpu.memory_space<vmem>>, vector<16x128xf32>
    %c0_2 = arith.constant 0 : index
    %c0_3 = arith.constant 0 : index
    %4 = vector.load %arg3[%c0_2, %c0_3] : memref<16x128xf32, #tpu.memory_space<vmem>>, vector<16x128xf32>
    %c0_4 = arith.constant 0 : index
    %c0_5 = arith.constant 0 : index
    %5 = vector.load %arg4[%c0_4, %c0_5] : memref<128x128xf32, #tpu.memory_space<vmem>>, vector<128x128xf32>
    %cst = arith.constant dense<0.000000e+00> : vector<16x128xf32>
    %6 = tpu.matmul %4, %5, %cst {dimension_numbers = #tpu.dot_dimension_numbers<[1], [0], [0], [1], [0, 0, 1, 1], [], []>} : vector<16x128xf32>, vector<128x128xf32>, vector<16x128xf32> -> vector<16x128xf32>
    %7 = arith.addf %3, %6 : vector<16x128xf32>
    %c0_6 = arith.constant 0 : index
    %c0_7 = arith.constant 0 : index
    %8 = vector.load %arg5[%c0_6, %c0_7] : memref<16x128xf32, #tpu.memory_space<vmem>>, vector<16x128xf32>
    tpu.vector_store %arg5[%c0_6, %c0_7], %7 {strides = array<i32>} : memref<16x128xf32, #tpu.memory_space<vmem>>, vector<16x128xf32>,
    return
  }
  func.func @transform_0(%arg0: i32, %arg1: i32, %arg2: i32) -> (i32, i32) {
    %c0_i32 = arith.constant 0 : i32
    return %arg0, %arg2 : i32, i32
  }
  func.func @transform_1(%arg0: i32, %arg1: i32, %arg2: i32) -> (i32, i32) {
    %c0_i32 = arith.constant 0 : i32
    return %arg2, %arg1 : i32, i32
  }
  func.func @transform_2(%arg0: i32, %arg1: i32, %arg2: i32) -> (i32, i32) {
    %c0_i32 = arith.constant 0 : i32
    return %arg0, %arg1 : i32, i32
  }
}

</mosaic_0001>

<llo_original>
// kernel: tpu_custom_call.1
$region0: #{tpu_custom_call.1}
  #allocation0 [shape = 'u32[]', space=smem, size = 0x4, offset = 0x4, fixed_abs, tag = 'smem constant byte address 0x4 - core index']
  #allocation1 [shape = 'u32[144,128]{1,0:T(1,128)}', space=vmem, size = 0x12000, scoped, tag = 'internal scratch']
  %s0 = inlined_call_operand.hbm [shape: f32[16,128], index: 0, kind: input, shape index: {}]
  %s1 = inlined_call_operand.hbm [shape: f32[128,128], index: 1, kind: input, shape index: {}]
  %s2 = inlined_call_operand.hbm [shape: f32[16,128], index: 2, kind: output, shape index: {}]
  %s3 = sld [smem:[#allocation0]]
  $region30: #{tpu_custom_call.1} parent=0
    _
  %s5 = ssub.s32 1, %s3
  %s6 = scalar_select 0, %s5, %s3
  $region1: #{tpu_custom_call.1} parent=0
    #allocation2 [shape = 'u8[8192]{0}', space=vmem, size = 0x2000, scoped, tag = 'input window, operand 0, single buffered']
    #allocation3 [shape = 's32[1]{0}', space=sflag, size = 0x4, scoped, tag = 'scoped memory for tpu_custom_call.1']
    #allocation4 [shape = 's32[1]{0}', space=sflag, size = 0x4, scoped, tag = 'scoped memory for tpu_custom_call.1']
    #allocation5 [shape = 'u8[65536]{0}', space=vmem, size = 0x10000, scoped, tag = 'input window, operand 1, single buffered']
    #allocation6 [shape = 's32[1]{0}', space=sflag, size = 0x4, scoped, tag = 'scoped memory for tpu_custom_call.1']
    #allocation7 [shape = 'u8[8192]{0}', space=vmem, size = 0x2000, scoped, tag = 'output window, operand 0, single buffered']
    %7 = vsyncpa [#allocation3], 0
    %8 = vsyncpa [#allocation6], 0
    %9 = vsyncpa [#allocation4], 0
    // Predicated region
    $region2: #{tpu_custom_call.1} parent=1 // pred_check
      _
    $region3: #{tpu_custom_call.1} parent=1 // pred_check_branch
      %11 = sbr.rel (0) target = $region5
    $region4: #{tpu_custom_call.1} parent=1 // pred_region
      %s13 = ssub.s32 256, 256
      %14 = vsyncadd [#allocation3], %s13
      %s15 = sshll.u32 [#allocation2], 4
      %s16 = int_to_ptr.vmem [resolvable:$true] %s15
      %21 = dma.hbm_to_vmem [thread:$0]  %s0, 256, %s16, [#allocation3], 128, 128, 8
    $region5: #{tpu_custom_call.1} parent=1 // pred_fallthru
      _
    // Predicated region
    $region6: #{tpu_custom_call.1} parent=1 // pred_check
      _
    $region7: #{tpu_custom_call.1} parent=1 // pred_check_branch
      %23 = sbr.rel (0) target = $region9
    $region8: #{tpu_custom_call.1} parent=1 // pred_region
      %s25 = ssub.s32 2048, 2048
      %26 = vsyncadd [#allocation6], %s25
      %s27 = sshll.u32 [#allocation5], 4
      %s28 = int_to_ptr.vmem [resolvable:$true] %s27
      %33 = dma.hbm_to_vmem [thread:$0]  %s1, 2048, %s28, [#allocation6], 128, 128, 8
    $region9: #{tpu_custom_call.1} parent=1 // pred_fallthru
      _
    // Predicated region
    $region10: #{tpu_custom_call.1} parent=1 // pred_check
      _
    $region11: #{tpu_custom_call.1} parent=1 // pred_check_branch
      %35 = sbr.rel (0) target = $region13
    $region12: #{tpu_custom_call.1} parent=1 // pred_region
      %36 = dma.done [#allocation3], 256
    $region13: #{tpu_custom_call.1} parent=1 // pred_fallthru
      _
    // Predicated region
    $region14: #{tpu_custom_call.1} parent=1 // pred_check
      _
    $region15: #{tpu_custom_call.1} parent=1 // pred_check_branch
      %38 = sbr.rel (0) target = $region17
    $region16: #{tpu_custom_call.1} parent=1 // pred_region
      %39 = dma.done [#allocation6], 2048
    $region17: #{tpu_custom_call.1} parent=1 // pred_fallthru
      _
    %p40 = scmp.eq.s32.totalorder 0, 0
    // Predicated region
    $region18: #{tpu_custom_call.1} parent=1 // pred_check
      %p41 = pneg %p40
    $region19: #{tpu_custom_call.1} parent=1 // pred_check_branch
      %43 = sbr.rel (%p41) target = $region21
    $region20: #{tpu_custom_call.1} parent=1 // pred_region
      %44 = vst [vmem:[#allocation7] sm:$0xff] 0.0
      %45 = vst [vmem:[#allocation7 + $0x8] sm:$0xff] 0.0
    $region21: #{tpu_custom_call.1} parent=1 // pred_fallthru
      _
    %v46 = vld [vmem:[#allocation7] sm:$0xff]
    %v47 = vld [vmem:[#allocation7 + $0x8] sm:$0xff]
    %v48 = vld [vmem:[#allocation2] sm:$0xff]
    %v49 = vld [vmem:[#allocation2 + $0x8] sm:$0xff]
    %v50 = vld [vmem:[#allocation5] sm:$0xff]
    %v51 = vld [vmem:[#allocation5 + $0x8] sm:$0xff]
    %v52 = vld [vmem:[#allocation5 + $0x10] sm:$0xff]
    %v53 = vld [vmem:[#allocation5 + $0x18] sm:$0xff]
    %v54 = vld [vmem:[#allocation5 + $0x20] sm:$0xff]
    %v55 = vld [vmem:[#allocation5 + $0x28] sm:$0xff]
    %v56 = vld [vmem:[#allocation5 + $0x30] sm:$0xff]
    %v57 = vld [vmem:[#allocation5 + $0x38] sm:$0xff]
    %v58 = vld [vmem:[#allocation5 + $0x40] sm:$0xff]
    %v59 = vld [vmem:[#allocation5 + $0x48] sm:$0xff]
    %v60 = vld [vmem:[#allocation5 + $0x50] sm:$0xff]
    %v61 = vld [vmem:[#allocation5 + $0x58] sm:$0xff]
    %v62 = vld [vmem:[#allocation5 + $0x60] sm:$0xff]
    %v63 = vld [vmem:[#allocation5 + $0x68] sm:$0xff]
    %v64 = vld [vmem:[#allocation5 + $0x70] sm:$0xff]
    %v65 = vld [vmem:[#allocation5 + $0x78] sm:$0xff]
    %66 = vmatprep.subr.mxu0 0.0
    %67 = vmatpush1.msra.mxu0 %v65
    %68 = vmatprep.subr.mxu0 0.0
    %69 = vmatpush1.msra.mxu0 %v64
    %70 = vmatprep.subr.mxu0 0.0
    %71 = vmatpush1.msra.mxu0 %v63
    %72 = vmatprep.subr.mxu0 0.0
    %73 = vmatpush1.msra.mxu0 %v62
    %74 = vmatprep.subr.mxu0 0.0
    %75 = vmatpush1.msra.mxu0 %v61
    %76 = vmatprep.subr.mxu0 0.0
    %77 = vmatpush1.msra.mxu0 %v60
    %78 = vmatprep.subr.mxu0 0.0
    %79 = vmatpush1.msra.mxu0 %v59
    %80 = vmatprep.subr.mxu0 0.0
    %81 = vmatpush1.msra.mxu0 %v58
    %82 = vmatprep.subr.mxu0 0.0
    %83 = vmatpush1.msra.mxu0 %v57
    %84 = vmatprep.subr.mxu0 0.0
    %85 = vmatpush1.msra.mxu0 %v56
    %86 = vmatprep.subr.mxu0 0.0
    %87 = vmatpush1.msra.mxu0 %v55
    %88 = vmatprep.subr.mxu0 0.0
    %89 = vmatpush1.msra.mxu0 %v54
    %90 = vmatprep.subr.mxu0 0.0
    %91 = vmatpush1.msra.mxu0 %v53
    %92 = vmatprep.subr.mxu0 0.0
    %93 = vmatpush1.msra.mxu0 %v52
    %94 = vmatprep.subr.mxu0 0.0
    %95 = vmatpush1.msra.mxu0 %v51
    %96 = vmatprep.subr.mxu0 0.0
    %97 = vmatpush1.msra.mxu0 %v50
    %98 = vmatprep.subr.mxu0 0.0
    %99 = vmatpush2.msra.mxu0 0.0
    %100 = vmatprep.subr.mxu0 0.0
    %101 = vmatpush2.msra.mxu0 0.0
    %102 = vmatprep.subr.mxu0 0.0
    %103 = vmatpush2.msra.mxu0 0.0
    %104 = vmatprep.subr.mxu0 0.0
    %105 = vmatpush2.msra.mxu0 0.0
    %106 = vmatprep.subr.mxu0 0.0
    %107 = vmatpush2.msra.mxu0 0.0
    %108 = vmatprep.subr.mxu0 0.0
    %109 = vmatpush2.msra.mxu0 0.0
    %110 = vmatprep.subr.mxu0 0.0
    %111 = vmatpush2.msra.mxu0 0.0
    %112 = vmatprep.subr.mxu0 0.0
    %113 = vmatpush2.msra.mxu0 0.0
    %114 = vmatprep.subr.mxu0 0.0
    %115 = vmatpush2.msra.mxu0 0.0
    %116 = vmatprep.subr.mxu0 0.0
    %117 = vmatpush2.msra.mxu0 0.0
    %118 = vmatprep.subr.mxu0 0.0
    %119 = vmatpush2.msra.mxu0 0.0
    %120 = vmatprep.subr.mxu0 0.0
    %121 = vmatpush2.msra.mxu0 0.0
    %122 = vmatprep.subr.mxu0 0.0
    %123 = vmatpush2.msra.mxu0 0.0
    %124 = vmatprep.subr.mxu0 0.0
    %125 = vmatpush2.msra.mxu0 0.0
    %126 = vmatprep.subr.mxu0 0.0
    %127 = vmatpush2.msra.mxu0 0.0
    %128 = vmatprep.subr.mxu0 0.0
    %129 = vmatpush2.msra.mxu0 0.0
    %130 = vmatprep.mubr.f32.mxu0 0.0
    %131 = vmatmul.mubr.f32.gmra.mxu0 %v48
    %v132 = vpop.f32.mrf.mxu0
    %v133 = vadd.f32 0.0, %v132
    %v134 = vpop.f32.mrf.mxu0
    %135 = vmatprep.mubr.f32.mxu0 0.0
    %136 = vmatmul.mubr.f32.gmra.mxu0 %v49
    %v137 = vpop.f32.mrf.mxu0
    %v138 = vadd.f32 0.0, %v137
    %v139 = vpop.f32.mrf.mxu0
    %140 = vdwg.mxu0
    %v141 = vadd.f32 %v46, %v133
    %v142 = vadd.f32 %v47, %v138
    %143 = vst [vmem:[#allocation7] sm:$0xff] %v141
    %144 = vst [vmem:[#allocation7 + $0x8] sm:$0xff] %v142
    // Predicated region
    $region22: #{tpu_custom_call.1} parent=1 // pred_check
      _
    $region23: #{tpu_custom_call.1} parent=1 // pred_check_branch
      %146 = sbr.rel (0) target = $region25
    $region24: #{tpu_custom_call.1} parent=1 // pred_region
      %s148 = ssub.s32 256, 256
      %149 = vsyncadd [#allocation4], %s148
      %s150 = sshll.u32 [#allocation7], 4
      %s151 = int_to_ptr.vmem [resolvable:$true] %s150
      %156 = dma.vmem_to_hbm [thread:$0]  %s151, 256, %s2, [#allocation4], 128, 128, 8
    $region25: #{tpu_custom_call.1} parent=1 // pred_fallthru
      _
    // Predicated region
    $region26: #{tpu_custom_call.1} parent=1 // pred_check
      _
    $region27: #{tpu_custom_call.1} parent=1 // pred_check_branch
      %158 = sbr.rel (0) target = $region29
    $region28: #{tpu_custom_call.1} parent=1 // pred_region
      %159 = dma.done [#allocation4], 256
    $region29: #{tpu_custom_call.1} parent=1 // pred_fallthru
      _
    %160 = vsyncpa [#allocation3], 1
    %161 = vsyncpa [#allocation6], 1
    %162 = vsyncpa [#allocation4], 1

</llo_original>
